<compile_context>
chip_gen: v7x
topology: tpu7x:2x2x1
jax: 0.10.0
libtpu: 0.0.40
codegen_flags: <defaults>
</compile_context>

<pallas_src>
import jax
import jax.numpy as jnp
from jax.experimental import pallas as pl
from jax.experimental.pallas import tpu as pltpu


def _linear_criterion_kernel(x_ref, w_ref, b_ref, ema_ref, mask_ref,
                             out_ref, acc_ref):
    # grid = (L, NCP, NCA); axis 2 (inner chunks) is the reduction axis.
    c = pl.program_id(2)

    @pl.when(c == 0)
    def _():
        acc_ref[...] = jnp.zeros_like(acc_ref)

    # pred^T = W[A,H] @ X[H,T] -> [A, T]; bf16 operands, f32 MXU accumulation.
    # x is already laid out [H, T] so this is a plain matmul (no XLU transpose).
    pred = jnp.dot(w_ref[...], x_ref[...], preferred_element_type=jnp.float32)
    pred = pred + b_ref[...]                                  # [A,1] lane-broadcast
    diff = (pred - ema_ref[...].astype(jnp.float32)) \
        * mask_ref[...].astype(jnp.float32)                   # [1,T] sublane-bcast
    # Fold the lane axis immediately: T//128 vreg adds + one tiny XLU reduce,
    # accumulated into a single (A, 1) f32 scratch (no big acc RMW traffic).
    acc_ref[...] += jnp.sum(diff * diff, axis=1, keepdims=True)

    @pl.when(c == pl.num_programs(2) - 1)
    def _():
        # One scalar per (layer, partition), broadcast into a lane-dense tile.
        out_ref[...] = jnp.full(out_ref.shape, jnp.sum(acc_ref[...]), jnp.float32)


def _tpu_vmem_and_cores():
    """(VMEM bytes per TensorCore, TensorCores per chip), conservative fallback."""
    try:
        vmem = int(pltpu.get_tpu_info().vmem_capacity_bytes)
        # 64-MiB-per-TC parts (v7x) have 2 TensorCores/chip; 128-MiB parts
        # (v5e / v6e) have 1.
        num_tc = 2 if vmem <= 96 * 1024 * 1024 else 1
    except Exception:
        vmem, num_tc = 64 * 1024 * 1024, 1   # conservative: small budget, no split
    return vmem, num_tc


def _choose_chunks(n, bytes_per_col, budget, num_tc):
    """Pick (T, NC, N_pad): a 128-aligned chunk width T over the fused batch*seq
    axis, the chunk count NC, and the zero-padded axis length N_pad = NC * T.
    T is capped so the per-step VMEM working set fits `budget`, and at 32768
    columns (xs blocks of a few MiB already sit at ~85% of the HBM roofline)."""
    t_cap = max(128, min(32768, budget // bytes_per_col) // 128 * 128)
    nc = -(-n // t_cap)                           # chunks needed for the budget
    if num_tc > 1 and n > 128:
        nc = -(-nc // num_tc) * num_tc            # chunk count multiple of #TCs
    t = -(-n // (nc * 128)) * 128                 # balanced, 128-aligned chunks
    return t, nc, nc * t


def multi_linear_criterion(xs, ema, ema_lens, weight, bias):
    """xs: [L, B, S2, H]; ema: [B, S1, A]; ema_lens: [B] (int);
    weight: [L, A, H]; bias: [L, A].  Returns per-layer losses [L] f32.

    Note: xs, weight and ema are streamed in bf16 (the kernel is HBM-bound);
    the loss therefore differs from a pure-f32 evaluation at ~bf16 precision.
    Call under jax.jit so the slice/cast/transpose/pad prep fuses into one
    HBM pass over xs."""
    L, B, S2, H = xs.shape
    S1, A = ema.shape[1], ema.shape[2]
    length = min(S1, S2)
    N = B * length

    vmem_bytes, num_tc = _tpu_vmem_and_cores()
    if vmem_bytes <= 96 * 1024 * 1024:            # v7x-class: 64 MiB VMEM per TC
        budget, vmem_limit = 28 * 1024 * 1024, 40 * 1024 * 1024
    else:                                         # v5e / v6e: 128 MiB VMEM
        budget, vmem_limit = 64 * 1024 * 1024, 96 * 1024 * 1024

    # Per-column VMEM bytes at chunk width T: double-buffered bf16 xs / ema /
    # mask blocks (4H + 4A + 4) plus ~4 Mosaic-materialized [A, T] f32
    # temporaries (pred, pred+b, diff, diff^2) -> 16A.
    bytes_per_col = 4 * H + 4 * A + 4 + 16 * A
    T, NC, N_pad = _choose_chunks(N, bytes_per_col, budget, num_tc)
    NCP = num_tc if (num_tc > 1 and NC >= num_tc and NC % num_tc == 0) else 1
    NCA = NC // NCP

    # ---- operand prep (fuses into one pass over xs when the wrapper is jitted).
    # TODO(synk): ideally the producer already hands xs over as bf16 [L, H, B*S]
    # so this transpose/cast pass disappears entirely.
    if length < S2:
        xs = xs[:, :, :length]
    if length < S1:
        ema = ema[:, :length]
    # [L, B, length, H] -> [L, H, N]: contraction dim on sublanes, batch*seq on lanes.
    x_t = jnp.transpose(xs.reshape(L, N, H), (0, 2, 1)).astype(jnp.bfloat16)
    w = weight.astype(jnp.bfloat16)
    bias3 = bias.astype(jnp.float32).reshape(L, A, 1)
    # ema^T [A, N] and per-position validity mask [1, N], both bf16 (0/1 exact).
    ema_t = jnp.transpose(ema, (2, 0, 1)).reshape(A, N).astype(jnp.bfloat16)
    valid = jnp.arange(length)[None, :] < ema_lens[:, None]
    mask = valid.reshape(1, N).astype(jnp.bfloat16)

    pad = N_pad - N
    if pad:
        x_t = jnp.pad(x_t, ((0, 0), (0, 0), (0, pad)))
        ema_t = jnp.pad(ema_t, ((0, 0), (0, pad)))
        mask = jnp.pad(mask, ((0, 0), (0, pad)))   # mask==0 -> padding contributes 0

    out = pl.pallas_call(
        _linear_criterion_kernel,
        out_shape=jax.ShapeDtypeStruct((L, NCP, 8, 128), jnp.float32),
        grid=(L, NCP, NCA),
        in_specs=[
            # xs [L, H, Npad] -> (H, T) blocks; chunk index = p*NCA + a.
            # (If an xprof trace shows inter-step DMA gaps on v7x, add
            #  pipeline_mode=pl.Buffered(3) here.)
            pl.BlockSpec((None, H, T), lambda l, p, a: (l, 0, p * NCA + a)),
            pl.BlockSpec((None, A, H), lambda l, p, a: (l, 0, 0)),   # weight
            pl.BlockSpec((None, A, 1), lambda l, p, a: (l, 0, 0)),   # bias
            pl.BlockSpec((A, T),       lambda l, p, a: (0, p * NCA + a)),  # ema^T
            pl.BlockSpec((1, T),       lambda l, p, a: (0, p * NCA + a)),  # mask
        ],
        out_specs=pl.BlockSpec((None, None, 8, 128), lambda l, p, a: (l, p, 0, 0)),
        scratch_shapes=[pltpu.VMEM((A, 1), jnp.float32)],
        compiler_params=pltpu.CompilerParams(
            dimension_semantics=("parallel", "parallel", "arbitrary"),
            vmem_limit_bytes=vmem_limit,
        ),
    )(x_t, w, bias3, ema_t, mask)

    # Scalar is broadcast over the (8,128) tile; sum the NCP partial losses.
    return out[:, :, 0, 0].sum(axis=1)


def _reference(xs, ema, ema_lens, weight, bias):
    """Pure-JAX reference using the same bf16 quantization of xs / W / ema that
    the kernel wrapper applies (so the check validates the kernel itself)."""
    q = lambda a: a.astype(jnp.bfloat16).astype(jnp.float32)
    L, B, S2, H = xs.shape
    length = min(S2, ema.shape[1])
    xq = q(xs[:, :, :length])
    emaq = q(ema[:, :length])
    wq = q(weight)
    pred = jnp.einsum('lbsh,lah->lbsa', xq, wq) + bias[:, None, None, :]
    diff = pred - emaq[None]
    mask = (jnp.arange(length)[None, :] < ema_lens[:, None]).astype(jnp.float32)
    return (diff * diff * mask[None, :, :, None]).sum(axis=(1, 2, 3))


if __name__ == "__main__":
    L = 3          # num_layers
    B = 2          # batch
    S = 16         # sequence length (s1 == s2)
    H = 32         # hidden_size (d2)
    A = 8          # art_dim (d1)

    key = jax.random.PRNGKey(0)
    k_xs, k_ema, k_w, k_b = jax.random.split(key, 4)

    xs = jax.random.normal(k_xs, (L, B, S, H), dtype=jnp.float32)
    ema = jax.random.normal(k_ema, (B, S, A), dtype=jnp.float32)
    ema_lens = jnp.array([16, 9], dtype=jnp.int32)

    w_std = (2.0 / 6.0) ** 0.5 / (A * H) ** 0.5
    weight = w_std * jax.random.normal(k_w, (L, A, H), dtype=jnp.float32)
    bias = jax.random.normal(k_b, (L, A), dtype=jnp.float32)

    # jit the wrapper so slice + cast + transpose + pad fuse into one HBM pass.
    fn = jax.jit(multi_linear_criterion)
    losses = fn(xs, ema, ema_lens, weight, bias)
    jax.block_until_ready(losses)

    ref = _reference(xs, ema, ema_lens, weight, bias)
    assert losses.shape == (L,)
    assert jnp.allclose(losses, ref, rtol=1e-3, atol=1e-2), (losses, ref)

    print("KERNEL_OK")
</pallas_src>

<mosaic_0001>
module attributes {stable_mosaic.version = 11 : i64} {
  func.func @_linear_criterion_kernel(%arg0: i32, %arg1: i32, %arg2: i32, %arg3: memref<1x32x128xbf16, #tpu.memory_space<vmem>>, %arg4: memref<1x8x32xbf16, #tpu.memory_space<vmem>>, %arg5: memref<1x8x1xf32, #tpu.memory_space<vmem>>, %arg6: memref<8x128xbf16, #tpu.memory_space<vmem>>, %arg7: memref<1x128xbf16, #tpu.memory_space<vmem>>, %arg8: memref<1x1x8x128xf32, #tpu.memory_space<vmem>>, %arg9: memref<8x1xf32, #tpu.memory_space<vmem>>) attributes {dimension_semantics = [#tpu.dimension_semantics<parallel>, #tpu.dimension_semantics<parallel>, #tpu.dimension_semantics<arbitrary>], iteration_bounds = array<i64: 3, 1, 1>, scalar_prefetch = 0 : i64, scratch_operands = 1 : i64, tpu.core_type = #tpu.core_type<tc>, window_params = [{transform_indices = @transform_0, window_bounds = array<i64: 1, 32, 128>}, {transform_indices = @transform_1, window_bounds = array<i64: 1, 8, 32>}, {transform_indices = @transform_2, window_bounds = array<i64: 1, 8, 1>}, {transform_indices = @transform_3, window_bounds = array<i64: 8, 128>}, {transform_indices = @transform_4, window_bounds = array<i64: 1, 128>}, {transform_indices = @transform_5, window_bounds = array<i64: 1, 1, 8, 128>}]} {
    %c0_i32 = arith.constant 0 : i32
    %0 = arith.cmpi eq, %arg2, %c0_i32 : i32
    %1 = arith.extui %0 : i1 to i32
    %c0_i32_0 = arith.constant 0 : i32
    %2 = arith.cmpi ne, %1, %c0_i32_0 : i32
    scf.if %2 {
      %cst_20 = arith.constant 0.000000e+00 : f32
      %28 = vector.broadcast %cst_20 : f32 to vector<8x1xf32>
      %c0_21 = arith.constant 0 : index
      %c0_22 = arith.constant 0 : index
      %29 = vector.load %arg9[%c0_21, %c0_22] : memref<8x1xf32, #tpu.memory_space<vmem>>, vector<8x1xf32>
      tpu.vector_store %arg9[%c0_21, %c0_22], %28 {strides = array<i32>} : memref<8x1xf32, #tpu.memory_space<vmem>>, vector<8x1xf32>,
    } else {
    }
    %c0 = arith.constant 0 : index
    %c0_1 = arith.constant 0 : index
    %c0_2 = arith.constant 0 : index
    %3 = vector.load %arg4[%c0, %c0_1, %c0_2] : memref<1x8x32xbf16, #tpu.memory_space<vmem>>, vector<1x8x32xbf16>
    %4 = vector.shape_cast %3 : vector<1x8x32xbf16> to vector<8x32xbf16>
    %c0_3 = arith.constant 0 : index
    %c0_4 = arith.constant 0 : index
    %c0_5 = arith.constant 0 : index
    %5 = vector.load %arg3[%c0_3, %c0_4, %c0_5] : memref<1x32x128xbf16, #tpu.memory_space<vmem>>, vector<1x32x128xbf16>
    %6 = vector.shape_cast %5 : vector<1x32x128xbf16> to vector<32x128xbf16>
    %cst = arith.constant dense<0.000000e+00> : vector<8x128xf32>
    %7 = tpu.matmul %4, %6, %cst {dimension_numbers = #tpu.dot_dimension_numbers<[1], [0], [0], [1], [0, 0, 1, 1], [], []>} : vector<8x32xbf16>, vector<32x128xbf16>, vector<8x128xf32> -> vector<8x128xf32>
    %c0_6 = arith.constant 0 : index
    %c0_7 = arith.constant 0 : index
    %c0_8 = arith.constant 0 : index
    %8 = vector.load %arg5[%c0_6, %c0_7, %c0_8] : memref<1x8x1xf32, #tpu.memory_space<vmem>>, vector<1x8x1xf32>
    %9 = vector.shape_cast %8 : vector<1x8x1xf32> to vector<8x1xf32>
    %10 = vector.broadcast %9 : vector<8x1xf32> to vector<8x128xf32>
    %11 = arith.addf %7, %10 : vector<8x128xf32>
    %c0_9 = arith.constant 0 : index
    %c0_10 = arith.constant 0 : index
    %12 = vector.load %arg6[%c0_9, %c0_10] : memref<8x128xbf16, #tpu.memory_space<vmem>>, vector<8x128xbf16>
    %13 = arith.extf %12 : vector<8x128xbf16> to vector<8x128xf32>
    %14 = arith.subf %11, %13 : vector<8x128xf32>
    %c0_11 = arith.constant 0 : index
    %c0_12 = arith.constant 0 : index
    %15 = vector.load %arg7[%c0_11, %c0_12] : memref<1x128xbf16, #tpu.memory_space<vmem>>, vector<1x128xbf16>
    %16 = arith.extf %15 : vector<1x128xbf16> to vector<1x128xf32>
    %17 = vector.broadcast %16 : vector<1x128xf32> to vector<8x128xf32>
    %18 = arith.mulf %14, %17 : vector<8x128xf32>
    %c0_13 = arith.constant 0 : index
    %c0_14 = arith.constant 0 : index
    %19 = vector.load %arg9[%c0_13, %c0_14] : memref<8x1xf32, #tpu.memory_space<vmem>>, vector<8x1xf32>
    %20 = arith.mulf %18, %18 : vector<8x128xf32>
    %cst_15 = arith.constant dense<0.000000e+00> : vector<8xf32>
    %21 = vector.multi_reduction <add>, %20, %cst_15 [1] : vector<8x128xf32> to vector<8xf32>
    %22 = vector.shape_cast %21 : vector<8xf32> to vector<8x1xf32>
    %23 = arith.addf %19, %22 : vector<8x1xf32>
    %c0_16 = arith.constant 0 : index
    %c0_17 = arith.constant 0 : index
    %24 = vector.load %arg9[%c0_16, %c0_17] : memref<8x1xf32, #tpu.memory_space<vmem>>, vector<8x1xf32>
    tpu.vector_store %arg9[%c0_16, %c0_17], %23 {strides = array<i32>} : memref<8x1xf32, #tpu.memory_space<vmem>>, vector<8x1xf32>,
    %c0_i32_18 = arith.constant 0 : i32
    %25 = arith.cmpi eq, %arg2, %c0_i32_18 : i32
    %26 = arith.extui %25 : i1 to i32
    %c0_i32_19 = arith.constant 0 : i32
    %27 = arith.cmpi ne, %26, %c0_i32_19 : i32
    scf.if %27 {
      %c0_20 = arith.constant 0 : index
      %c0_21 = arith.constant 0 : index
      %28 = vector.load %arg9[%c0_20, %c0_21] : memref<8x1xf32, #tpu.memory_space<vmem>>, vector<8x1xf32>
      %29 = vector.shape_cast %28 : vector<8x1xf32> to vector<1x8x1xf32>
      %cst_22 = arith.constant dense<0.000000e+00> : vector<1xf32>
      %30 = vector.multi_reduction <add>, %29, %cst_22 [1, 2] : vector<1x8x1xf32> to vector<1xf32>
      %31 = vector.shape_cast %30 : vector<1xf32> to vector<1x1x1xf32>
      %32 = vector.extract %31[0, 0, 0] : f32 from vector<1x1x1xf32>
      %33 = vector.broadcast %32 : f32 to vector<8x128xf32>
      %c0_23 = arith.constant 0 : index
      %c0_24 = arith.constant 0 : index
      %c0_25 = arith.constant 0 : index
      %c0_26 = arith.constant 0 : index
      %34 = vector.load %arg8[%c0_23, %c0_24, %c0_25, %c0_26] : memref<1x1x8x128xf32, #tpu.memory_space<vmem>>, vector<1x1x8x128xf32>
      %35 = vector.shape_cast %34 : vector<1x1x8x128xf32> to vector<8x128xf32>
      %36 = vector.shape_cast %33 : vector<8x128xf32> to vector<1x1x8x128xf32>
      tpu.vector_store %arg8[%c0_23, %c0_24, %c0_25, %c0_26], %36 {strides = array<i32>} : memref<1x1x8x128xf32, #tpu.memory_space<vmem>>, vector<1x1x8x128xf32>,
    } else {
    }
    return
  }
  func.func @transform_0(%arg0: i32, %arg1: i32, %arg2: i32) -> (i32, i32, i32) {
    %c1_i32 = arith.constant 1 : i32
    %0 = arith.muli %arg1, %c1_i32 : i32
    %1 = arith.addi %0, %arg2 : i32
    %c0_i32 = arith.constant 0 : i32
    %c0_i32_0 = arith.constant 0 : i32
    return %arg0, %c0_i32, %1 : i32, i32, i32
  }
  func.func @transform_1(%arg0: i32, %arg1: i32, %arg2: i32) -> (i32, i32, i32) {
    %c0_i32 = arith.constant 0 : i32
    %c0_i32_0 = arith.constant 0 : i32
    %c0_i32_1 = arith.constant 0 : i32
    return %arg0, %c0_i32, %c0_i32_0 : i32, i32, i32
  }
  func.func @transform_2(%arg0: i32, %arg1: i32, %arg2: i32) -> (i32, i32, i32) {
    %c0_i32 = arith.constant 0 : i32
    %c0_i32_0 = arith.constant 0 : i32
    %c0_i32_1 = arith.constant 0 : i32
    return %arg0, %c0_i32, %c0_i32_0 : i32, i32, i32
  }
  func.func @transform_3(%arg0: i32, %arg1: i32, %arg2: i32) -> (i32, i32) {
    %c1_i32 = arith.constant 1 : i32
    %0 = arith.muli %arg1, %c1_i32 : i32
    %1 = arith.addi %0, %arg2 : i32
    %c0_i32 = arith.constant 0 : i32
    %c0_i32_0 = arith.constant 0 : i32
    return %c0_i32, %1 : i32, i32
  }
  func.func @transform_4(%arg0: i32, %arg1: i32, %arg2: i32) -> (i32, i32) {
    %c1_i32 = arith.constant 1 : i32
    %0 = arith.muli %arg1, %c1_i32 : i32
    %1 = arith.addi %0, %arg2 : i32
    %c0_i32 = arith.constant 0 : i32
    %c0_i32_0 = arith.constant 0 : i32
    return %c0_i32, %1 : i32, i32
  }
  func.func @transform_5(%arg0: i32, %arg1: i32, %arg2: i32) -> (i32, i32, i32, i32) {
    %c0_i32 = arith.constant 0 : i32
    %c0_i32_0 = arith.constant 0 : i32
    %c0_i32_1 = arith.constant 0 : i32
    return %arg0, %arg1, %c0_i32, %c0_i32_0 : i32, i32, i32, i32
  }
}

</mosaic_0001>

<llo_original>
// kernel: multi_linear_criterion.1
$region0: #{multi_linear_criterion.1}
  #allocation0 [shape = 'u32[]', space=smem, size = 0x4, offset = 0x4, fixed_abs, tag = 'smem constant byte address 0x4 - core index']
  #allocation1 [shape = 'u32[144,128]{1,0:T(1,128)}', space=vmem, size = 0x12000, scoped, tag = 'internal scratch']
  #allocation2 [shape = 'f32[8,1]{1,0:T(8,128)}', space=vmem, size = 0x1000, scoped, tag = 'scratch operand']
  %s0 = inlined_call_operand.vmem [shape: bf16[3,32,128], index: 0, kind: input, shape index: {}]
  %s1 = inlined_call_operand.vmem [shape: bf16[3,8,32], index: 1, kind: input, shape index: {}]
  %s2 = inlined_call_operand.vmem [shape: f32[3,8,1], index: 2, kind: input, shape index: {}]
  %s3 = inlined_call_operand.vmem [shape: bf16[8,128], index: 3, kind: input, shape index: {}]
  %s4 = inlined_call_operand.vmem [shape: bf16[1,128], index: 4, kind: input, shape index: {}]
  %s5 = inlined_call_operand.vmem [shape: f32[3,1,8,128], index: 5, kind: output, shape index: {}]
  %s6 = sld [smem:[#allocation0]]
  $region61: #{multi_linear_criterion.1} parent=0
    _
  %s8 = ssub.s32 1, %s6
  %s9 = scalar_select 0, %s8, %s6
  loop: start=0, step=1, limit=5
  $region2: #{multi_linear_criterion.1} parent=0 // loop_pre_header
    _
  $region3: #{multi_linear_criterion.1} parent=0 // loop_header
    %s11 = sphi 0, %s15
    %p12 = scmp.ge.s32.totalorder %s11, 5
    %s18 = sphi 0, %s37
    %s19 = sphi 0, %s33
    %s20 = sphi 0, %s29
    %s21 = sphi 0, %s18
    %s22 = sphi 0, %s19
    %s23 = sphi 0, %s20
    %s24 = sphi 0, %s21
    %s25 = sphi 0, %s22
    %s26 = sphi 0, %s23
    %s44 = sphi 0, %s46
    %s47 = sphi 0, %s44
    %s48 = sphi 0, %s47
    %s64 = sphi 0, %s48
    %s70 = sphi 0, %s72
    %s73 = sphi 0, %s70
    %s74 = sphi 0, %s73
    %s90 = sphi 0, %s74
    %s96 = sphi 0, %s98
    %s99 = sphi 0, %s96
    %s100 = sphi 0, %s99
    %s116 = sphi 0, %s100
    %s124 = sphi 0, %s126
    %s127 = sphi 0, %s124
    %s128 = sphi 0, %s127
    %s144 = sphi 0, %s128
    %s152 = sphi 0, %s154
    %s155 = sphi 0, %s152
    %s156 = sphi 0, %s155
    %s172 = sphi 0, %s156
    %s180 = sphi 0, %s182
    %s183 = sphi 0, %s180
    %s184 = sphi 0, %s183
    %s200 = sphi 0, %s184
  $region4: #{multi_linear_criterion.1} parent=0 // loop_header_branch
    %14 = sbr.rel (%p12) target = $region8
  $region5: #{multi_linear_criterion.1} parent=0 // loop_body
    %s16 = ssub.s32 %s11, 1
    %s17 = ssub.s32 %s11, 2
    %s27 = sadd.s32 1, %s20
    %p28 = scmp.ge.s32.totalorder %s27, 1
    %s29 = scalar_select %p28, 0, %s27
    %s30 = sadd.s32 1, %s19
    %s31 = scalar_select %p28, %s30, %s19
    %p32 = scmp.ge.s32.totalorder %s31, 1
    %s33 = scalar_select %p32, 0, %s31
    %s34 = sadd.s32 1, %s18
    %s35 = scalar_select %p32, %s34, %s18
    %p36 = scmp.ge.s32.totalorder %s35, 3
    %s37 = scalar_select %p36, 0, %s35
    %s38 = sadd.s32 %s19, %s20
    %s39 = sadd.s32 %s33, %s29
    %s40 = ssub.s32 %s18, %s37
    %s41 = ssub.s32 %s38, %s39
    %s42 = sor.u32 %s40, %s41
    %p43 = scmp.eq.s32.totalorder %s42, 0
    %s45 = sadd.s32 %s44, 1
    %s46 = scalar_select %p43, %s44, %s45
    %p49 = pneg %p43
    %p50 = scmp.eq.s32.totalorder %s11, 2
    %p51 = por %p49, %p50
    %p52 = scmp.ne.s32.totalorder %s44, %s47
    %p53 = scmp.eq.s32.totalorder %s11, 0
    %p54 = por %p52, %p53
    %p55 = scmp.ne.s32.totalorder %s44, %s47
    %p56 = scmp.eq.s32.totalorder %s16, 2
    %p57 = por %p55, %p56
    %p58 = scmp.ne.s32.totalorder %s47, %s48
    %p59 = scmp.eq.s32.totalorder %s16, 0
    %p60 = por %p58, %p59
    %p61 = scmp.ne.s32.totalorder %s47, %s48
    %p62 = scmp.eq.s32.totalorder %s17, 2
    %p63 = por %p61, %p62
    %p65 = scmp.ne.s32.totalorder %s48, %s64
    %p66 = scmp.eq.s32.totalorder %s17, 0
    %p67 = por %p65, %p66
    %s68 = ssub.s32 %s18, %s37
    %p69 = scmp.eq.s32.totalorder %s68, 0
    %s71 = sadd.s32 %s70, 1
    %s72 = scalar_select %p69, %s70, %s71
    %p75 = pneg %p69
    %p76 = scmp.eq.s32.totalorder %s11, 2
    %p77 = por %p75, %p76
    %p78 = scmp.ne.s32.totalorder %s70, %s73
    %p79 = scmp.eq.s32.totalorder %s11, 0
    %p80 = por %p78, %p79
    %p81 = scmp.ne.s32.totalorder %s70, %s73
    %p82 = scmp.eq.s32.totalorder %s16, 2
    %p83 = por %p81, %p82
    %p84 = scmp.ne.s32.totalorder %s73, %s74
    %p85 = scmp.eq.s32.totalorder %s16, 0
    %p86 = por %p84, %p85
    %p87 = scmp.ne.s32.totalorder %s73, %s74
    %p88 = scmp.eq.s32.totalorder %s17, 2
    %p89 = por %p87, %p88
    %p91 = scmp.ne.s32.totalorder %s74, %s90
    %p92 = scmp.eq.s32.totalorder %s17, 0
    %p93 = por %p91, %p92
    %s94 = ssub.s32 %s18, %s37
    %p95 = scmp.eq.s32.totalorder %s94, 0
    %s97 = sadd.s32 %s96, 1
    %s98 = scalar_select %p95, %s96, %s97
    %p101 = pneg %p95
    %p102 = scmp.eq.s32.totalorder %s11, 2
    %p103 = por %p101, %p102
    %p104 = scmp.ne.s32.totalorder %s96, %s99
    %p105 = scmp.eq.s32.totalorder %s11, 0
    %p106 = por %p104, %p105
    %p107 = scmp.ne.s32.totalorder %s96, %s99
    %p108 = scmp.eq.s32.totalorder %s16, 2
    %p109 = por %p107, %p108
    %p110 = scmp.ne.s32.totalorder %s99, %s100
    %p111 = scmp.eq.s32.totalorder %s16, 0
    %p112 = por %p110, %p111
    %p113 = scmp.ne.s32.totalorder %s99, %s100
    %p114 = scmp.eq.s32.totalorder %s17, 2
    %p115 = por %p113, %p114
    %p117 = scmp.ne.s32.totalorder %s100, %s116
    %p118 = scmp.eq.s32.totalorder %s17, 0
    %p119 = por %p117, %p118
    %s120 = sadd.s32 %s19, %s20
    %s121 = sadd.s32 %s33, %s29
    %s122 = ssub.s32 %s120, %s121
    %p123 = scmp.eq.s32.totalorder %s122, 0
    %s125 = sadd.s32 %s124, 1
    %s126 = scalar_select %p123, %s124, %s125
    %p129 = pneg %p123
    %p130 = scmp.eq.s32.totalorder %s11, 2
    %p131 = por %p129, %p130
    %p132 = scmp.ne.s32.totalorder %s124, %s127
    %p133 = scmp.eq.s32.totalorder %s11, 0
    %p134 = por %p132, %p133
    %p135 = scmp.ne.s32.totalorder %s124, %s127
    %p136 = scmp.eq.s32.totalorder %s16, 2
    %p137 = por %p135, %p136
    %p138 = scmp.ne.s32.totalorder %s127, %s128
    %p139 = scmp.eq.s32.totalorder %s16, 0
    %p140 = por %p138, %p139
    %p141 = scmp.ne.s32.totalorder %s127, %s128
    %p142 = scmp.eq.s32.totalorder %s17, 2
    %p143 = por %p141, %p142
    %p145 = scmp.ne.s32.totalorder %s128, %s144
    %p146 = scmp.eq.s32.totalorder %s17, 0
    %p147 = por %p145, %p146
    %s148 = sadd.s32 %s19, %s20
    %s149 = sadd.s32 %s33, %s29
    %s150 = ssub.s32 %s148, %s149
    %p151 = scmp.eq.s32.totalorder %s150, 0
    %s153 = sadd.s32 %s152, 1
    %s154 = scalar_select %p151, %s152, %s153
    %p157 = pneg %p151
    %p158 = scmp.eq.s32.totalorder %s11, 2
    %p159 = por %p157, %p158
    %p160 = scmp.ne.s32.totalorder %s152, %s155
    %p161 = scmp.eq.s32.totalorder %s11, 0
    %p162 = por %p160, %p161
    %p163 = scmp.ne.s32.totalorder %s152, %s155
    %p164 = scmp.eq.s32.totalorder %s16, 2
    %p165 = por %p163, %p164
    %p166 = scmp.ne.s32.totalorder %s155, %s156
    %p167 = scmp.eq.s32.totalorder %s16, 0
    %p168 = por %p166, %p167
    %p169 = scmp.ne.s32.totalorder %s155, %s156
    %p170 = scmp.eq.s32.totalorder %s17, 2
    %p171 = por %p169, %p170
    %p173 = scmp.ne.s32.totalorder %s156, %s172
    %p174 = scmp.eq.s32.totalorder %s17, 0
    %p175 = por %p173, %p174
    %s176 = ssub.s32 %s18, %s37
    %s177 = ssub.s32 %s19, %s33
    %s178 = sor.u32 %s176, %s177
    %p179 = scmp.eq.s32.totalorder %s178, 0
    %s181 = sadd.s32 %s180, 1
    %s182 = scalar_select %p179, %s180, %s181
    %p185 = pneg %p179
    %p186 = scmp.eq.s32.totalorder %s11, 2
    %p187 = por %p185, %p186
    %p188 = scmp.ne.s32.totalorder %s180, %s183
    %p189 = scmp.eq.s32.totalorder %s11, 0
    %p190 = por %p188, %p189
    %p191 = scmp.ne.s32.totalorder %s180, %s183
    %p192 = scmp.eq.s32.totalorder %s16, 2
    %p193 = por %p191, %p192
    %p194 = scmp.ne.s32.totalorder %s183, %s184
    %p195 = scmp.eq.s32.totalorder %s16, 0
    %p196 = por %p194, %p195
    %p197 = scmp.ne.s32.totalorder %s183, %s184
    %p198 = scmp.eq.s32.totalorder %s17, 2
    %p199 = por %p197, %p198
    %p201 = scmp.ne.s32.totalorder %s184, %s200
    %p202 = scmp.eq.s32.totalorder %s17, 0
    %p203 = por %p201, %p202
    %p204 = scmp.le.s32.totalorder 1, %s11
    %p205 = scmp.lt.s32.totalorder %s11, 4
    %p206 = pnand %p204, %p205
    %p207 = pneg %p206
    // Predicated region
    $region9: #{multi_linear_criterion.1} parent=5 // pred_check
      _
    $region10: #{multi_linear_criterion.1} parent=5 // pred_check_branch
      %209 = sbr.rel (%p206) target = $region12
    $region11: #{multi_linear_criterion.1} parent=5 // pred_region
      %s210 = ssub.s32 %s11, 1
      // Predicated region
      $region13: #{multi_linear_criterion.1} parent=11 // pred_check
        %p211 = pneg %p140
      $region14: #{multi_linear_criterion.1} parent=11 // pred_check_branch
        %213 = sbr.rel (%p211) target = $region16
      $region15: #{multi_linear_criterion.1} parent=11 // pred_region
        %s214 = sadd.s32 %s22, %s23
        %p215 = scmp.lt.s32.totalorder %s214, 0
        %s216 = scalar_select %p215, %s214, 0
        %s217 = smul.addr %s216, 4
        %s218 = scalar_lea.vmem %s3, %s217
        %s219 = sadd.s32 %s22, %s23
      $region16: #{multi_linear_criterion.1} parent=11 // pred_fallthru
        _
      // Predicated region
      $region17: #{multi_linear_criterion.1} parent=11 // pred_check
        %p220 = pneg %p168
      $region18: #{multi_linear_criterion.1} parent=11 // pred_check_branch
        %222 = sbr.rel (%p220) target = $region20
      $region19: #{multi_linear_criterion.1} parent=11 // pred_region
        %s223 = sadd.s32 %s22, %s23
        %p224 = scmp.lt.s32.totalorder %s223, 0
        %s225 = scalar_select %p224, %s223, 0
        %s226 = scalar_lea.vmem %s4, %s225
        %s227 = sadd.s32 %s22, %s23
      $region20: #{multi_linear_criterion.1} parent=11 // pred_fallthru
        _
    $region12: #{multi_linear_criterion.1} parent=5 // pred_fallthru
      _
    %p228 = scmp.lt.s32.totalorder %s11, 3
    // Predicated region
    $region21: #{multi_linear_criterion.1} parent=5 // pred_check
      %p229 = pneg %p228
    $region22: #{multi_linear_criterion.1} parent=5 // pred_check_branch
      %231 = sbr.rel (%p229) target = $region24
    $region23: #{multi_linear_criterion.1} parent=5 // pred_region
      // Predicated region
      $region25: #{multi_linear_criterion.1} parent=23 // pred_check
        %p232 = pneg %p54
      $region26: #{multi_linear_criterion.1} parent=23 // pred_check_branch
        %234 = sbr.rel (%p232) target = $region28
      $region27: #{multi_linear_criterion.1} parent=23 // pred_region
        %s235 = sadd.s32 %s19, %s20
        %p236 = scmp.lt.s32.totalorder %s18, 2
        %s237 = scalar_select %p236, %s18, 2
        %p238 = scmp.lt.s32.totalorder %s235, 0
        %s239 = scalar_select %p238, %s235, 0
        %s240 = smul.addr %s237, 4
        %s241 = sadd.s32 %s239, %s240
        %s242 = smul.addr %s241, 4
        %s243 = scalar_lea.vmem %s0, %s242
        %s244 = sadd.s32 %s19, %s20
      $region28: #{multi_linear_criterion.1} parent=23 // pred_fallthru
        _
      // Predicated region
      $region29: #{multi_linear_criterion.1} parent=23 // pred_check
        %p245 = pneg %p80
      $region30: #{multi_linear_criterion.1} parent=23 // pred_check_branch
        %247 = sbr.rel (%p245) target = $region32
      $region31: #{multi_linear_criterion.1} parent=23 // pred_region
        %p248 = scmp.lt.s32.totalorder %s18, 2
        %s249 = scalar_select %p248, %s18, 2
        %s250 = smul.addr %s249, 4
        %s251 = scalar_lea.vmem %s1, %s250
      $region32: #{multi_linear_criterion.1} parent=23 // pred_fallthru
        _
      // Predicated region
      $region33: #{multi_linear_criterion.1} parent=23 // pred_check
        %p252 = pneg %p106
      $region34: #{multi_linear_criterion.1} parent=23 // pred_check_branch
        %254 = sbr.rel (%p252) target = $region36
      $region35: #{multi_linear_criterion.1} parent=23 // pred_region
        %p255 = scmp.lt.s32.totalorder %s18, 2
        %s256 = scalar_select %p255, %s18, 2
        %s257 = smul.addr %s256, 8
        %s258 = scalar_lea.vmem %s2, %s257
      $region36: #{multi_linear_criterion.1} parent=23 // pred_fallthru
        _
    $region24: #{multi_linear_criterion.1} parent=5 // pred_fallthru
      _
    %p259 = scmp.le.s32.totalorder 1, %s11
    %p260 = scmp.lt.s32.totalorder %s11, 4
    %p261 = pnand %p259, %p260
    %p262 = pneg %p261
    // Predicated region
    $region37: #{multi_linear_criterion.1} parent=5 // pred_check
      _
    $region38: #{multi_linear_criterion.1} parent=5 // pred_check_branch
      %264 = sbr.rel (%p261) target = $region40
    $region39: #{multi_linear_criterion.1} parent=5 // pred_region
      %s265 = ssub.s32 %s11, 1
      %s266 = sadd.s32 %s22, %s23
      %p267 = scmp.lt.s32.totalorder %s21, 2
      %s268 = scalar_select %p267, %s21, 2
      %p269 = scmp.lt.s32.totalorder %s266, 0
      %s270 = scalar_select %p269, %s266, 0
      %s271 = smul.addr %s268, 4
      %s272 = sadd.s32 %s270, %s271
      %s273 = smul.addr %s272, 4
      %s274 = scalar_lea.vmem %s0, %s273
      %p275 = pneg %p60
      %p276 = pneg %p57
      %p277 = scmp.lt.s32.totalorder %s21, 2
      %s278 = scalar_select %p277, %s21, 2
      %s279 = smul.addr %s278, 4
      %s280 = scalar_lea.vmem %s1, %s279
      %p281 = pneg %p86
      %p282 = pneg %p83
      %p283 = scmp.lt.s32.totalorder %s21, 2
      %s284 = scalar_select %p283, %s21, 2
      %s285 = smul.addr %s284, 8
      %s286 = scalar_lea.vmem %s2, %s285
      %p287 = pneg %p112
      %p288 = pneg %p109
      %s289 = sadd.s32 %s22, %s23
      %p290 = scmp.lt.s32.totalorder %s289, 0
      %s291 = scalar_select %p290, %s289, 0
      %s292 = smul.addr %s291, 4
      %s293 = scalar_lea.vmem %s3, %s292
      %p294 = pneg %p140
      %p295 = pneg %p137
      %s296 = sadd.s32 %s22, %s23
      %p297 = scmp.lt.s32.totalorder %s296, 0
      %s298 = scalar_select %p297, %s296, 0
      %s299 = scalar_lea.vmem %s4, %s298
      %p300 = pneg %p168
      %p301 = pneg %p165
      %p302 = pneg %p196
      %p303 = pneg %p193
      %p304 = scmp.lt.s32.totalorder %s21, 2
      %s305 = scalar_select %p304, %s21, 2
      %p306 = scmp.lt.s32.totalorder %s22, 0
      %s307 = scalar_select %p306, %s22, 0
      %s308 = sadd.s32 %s307, %s305
      %s309 = smul.addr %s308, 8
      %s310 = scalar_lea.vmem %s5, %s309
      %s311 = sadd.s32 %s22, %s23
      %p312 = scmp.lt.s32.totalorder %s21, 2
      %s313 = scalar_select %p312, %s21, 2
      %p314 = scmp.lt.s32.totalorder %s311, 0
      %s315 = scalar_select %p314, %s311, 0
      %s316 = smul.addr %s313, 4
      %s317 = sadd.s32 %s315, %s316
      %s318 = smul.addr %s317, 4
      %s319 = scalar_lea.vmem %s0, %s318
      %s320 = sadd.s32 %s22, %s23
      %p321 = scmp.lt.s32.totalorder %s21, 2
      %s322 = scalar_select %p321, %s21, 2
      %s323 = smul.addr %s322, 4
      %s324 = scalar_lea.vmem %s1, %s323
      %p325 = scmp.lt.s32.totalorder %s21, 2
      %s326 = scalar_select %p325, %s21, 2
      %s327 = smul.addr %s326, 8
      %s328 = scalar_lea.vmem %s2, %s327
      %s329 = sadd.s32 %s22, %s23
      %p330 = scmp.lt.s32.totalorder %s329, 0
      %s331 = scalar_select %p330, %s329, 0
      %s332 = smul.addr %s331, 4
      %s333 = scalar_lea.vmem %s3, %s332
      %s334 = sadd.s32 %s22, %s23
      %s335 = sadd.s32 %s22, %s23
      %p336 = scmp.lt.s32.totalorder %s335, 0
      %s337 = scalar_select %p336, %s335, 0
      %s338 = scalar_lea.vmem %s4, %s337
      %s339 = sadd.s32 %s22, %s23
      %p340 = scmp.lt.s32.totalorder %s21, 2
      %s341 = scalar_select %p340, %s21, 2
      %p342 = scmp.lt.s32.totalorder %s22, 0
      %s343 = scalar_select %p342, %s22, 0
      %s344 = sadd.s32 %s343, %s341
      %s345 = smul.addr %s344, 8
      %s346 = scalar_lea.vmem %s5, %s345
      %p348 = scmp.eq.s32.totalorder %s23, 0
      // Predicated region
      $region41: #{multi_linear_criterion.1} parent=39 // pred_check
        %p349 = pneg %p348
      $region42: #{multi_linear_criterion.1} parent=39 // pred_check_branch
        %351 = sbr.rel (%p349) target = $region44
      $region43: #{multi_linear_criterion.1} parent=39 // pred_region
        %vm352 = vcmask 7168
        %353 = vst.msk [vmem:[#allocation2] sm:$0xff] %vm352, 0.0
      $region44: #{multi_linear_criterion.1} parent=39 // pred_fallthru
        _
      %v354 = vld [vmem:[%s324] sm:$0xf]
      %v355 = vld [vmem:[%s319] sm:$0xf]
      %v356 = vld [vmem:[%s319 + $0x4] sm:$0xf]
      %v357 = vld [vmem:[%s319 + $0x8] sm:$0xf]
      %v358 = vld [vmem:[%s319 + $0xc] sm:$0xf]
      %v359 = vld [vmem:[%s328] sm:$0xff]
      %361 = vset.pattern.permute.xlu0 0
      %362 = vperm.xlu0 %361, %v359
      %v363 = vpop.permute.xlu0 %362
      %v369 = vunpack.c.l.b16 %v355
      %v370 = vunpack.c.l.b16 %v356
      %v371 = vunpack.c.l.b16 %v357
      %v372 = vunpack.c.l.b16 %v358
      %v373 = vpack.c.b16 %v370, %v369
      %v374 = vpack.c.b16 %v372, %v371
      %vm377 = vcmask 261120
      %v379 = vsel %vm377, %v354, 0
      %381 = vmatprep.subr.bf16.mxu0 0
      %382 = vmatpush1.bf16.msra.mxu0 %v373
      %383 = vmatprep.subr.bf16.mxu0 0
      %384 = vmatpush1.bf16.msra.mxu0 %v374
      %385 = vmatprep.subr.bf16.mxu0 0
      %386 = vmatpush1.bf16.msra.mxu0 0
      %387 = vmatprep.subr.bf16.mxu0 0
      %388 = vmatpush1.bf16.msra.mxu0 0
      %389 = vmatprep.subr.bf16.mxu0 0
      %390 = vmatpush1.bf16.msra.mxu0 0
      %391 = vmatprep.subr.bf16.mxu0 0
      %392 = vmatpush1.bf16.msra.mxu0 0
      %393 = vmatprep.subr.bf16.mxu0 0
      %394 = vmatpush1.bf16.msra.mxu0 0
      %395 = vmatprep.subr.bf16.mxu0 0
      %396 = vmatpush1.bf16.msra.mxu0 0
      %397 = vmatprep.subr.bf16.mxu0 0
      %398 = vmatpush1.bf16.msra.mxu0 0
      %399 = vmatprep.subr.bf16.mxu0 0
      %400 = vmatpush1.bf16.msra.mxu0 0
      %401 = vmatprep.subr.bf16.mxu0 0
      %402 = vmatpush1.bf16.msra.mxu0 0
      %403 = vmatprep.subr.bf16.mxu0 0
      %404 = vmatpush1.bf16.msra.mxu0 0
      %405 = vmatprep.subr.bf16.mxu0 0
      %406 = vmatpush1.bf16.msra.mxu0 0
      %407 = vmatprep.subr.bf16.mxu0 0
      %408 = vmatpush1.bf16.msra.mxu0 0
      %409 = vmatprep.subr.bf16.mxu0 0
      %410 = vmatpush1.bf16.msra.mxu0 0
      %411 = vmatprep.subr.bf16.mxu0 0
      %412 = vmatpush1.bf16.msra.mxu0 0
      %413 = vmatprep.mubr.bf16.mxu0 0
      %414 = vmatmul.mubr.bf16.gmra.mrb[0].mxu0 %v379
      %v415 = vpop.f32.mrb[0].mxu0
      %v416 = vadd.f32 %v363, %v415
      %v417 = vpop.f32.mrb[0].mxu0
      %v418 = vpop.f32.mrb[0].mxu0
      %v419 = vpop.f32.mrb[0].mxu0
      %420 = vdwg.mxu0
      %v421 = vld [vmem:[%s333] sm:$0xf]
      %v422 = vunpack.c.l.bf16 %v421
      %v423 = vsub.f32 %v416, %v422
      %v424 = vld [vmem:[%s338] sm:$0x1]
      %v425 = vunpack.c.l.bf16 %v424
      %v426 = vlaneseq
      %v427 = vshrl.u32 %v426, 7
      %v428 = vsub.s32 0, %v427
      %v429 = vrot.slane %v425, %v428
      %v430 = vmul.f32 %v423, %v429
      %v431 = vld [vmem:[#allocation2] sm:$0xff]
      %v432 = vmul.f32 %v430, %v430
      %433 = vadd.xlane.f32.xlu0 %v432
      %v434 = vpop.xlane.xlu0 %433
      %v435 = vadd.f32 %v431, %v434
      %vm436 = vcmask 7168
      %437 = vst.msk [vmem:[#allocation2] sm:$0xff] %vm436, %v435
      // Predicated region
      $region45: #{multi_linear_criterion.1} parent=39 // pred_check
        %p438 = pneg %p348
      $region46: #{multi_linear_criterion.1} parent=39 // pred_check_branch
        %440 = sbr.rel (%p438) target = $region48
      $region47: #{multi_linear_criterion.1} parent=39 // pred_region
        %v441 = vld [vmem:[#allocation2] sm:$0xff]
        %v442 = vsel %vm436, %v441, 0.0
        %443 = vadd.xlane.f32.xlu0 %v442
        %v444 = vpop.xlane.xlu0 %443
        %v445 = vrot.slane %v444, 4
        %v446 = vadd.f32 %v444, %v445
        %v447 = vrot.slane %v446, 2
        %v448 = vadd.f32 %v446, %v447
        %v449 = vrot.slane %v448, 1
        %v450 = vadd.f32 %v448, %v449
        %s451 = vtos %v450
        %v452 = vstv %s451
        %453 = vst [vmem:[%s346] sm:$0xff] %v452
      $region48: #{multi_linear_criterion.1} parent=39 // pred_fallthru
        _
      %p454 = scmp.lt.s32.totalorder %s21, 2
      %s455 = scalar_select %p454, %s21, 2
      %p456 = scmp.lt.s32.totalorder %s22, 0
      %s457 = scalar_select %p456, %s22, 0
      %s458 = sadd.s32 %s457, %s455
      %s459 = smul.addr %s458, 8
      %s460 = scalar_lea.vmem %s5, %s459
      // Predicated region
      $region49: #{multi_linear_criterion.1} parent=39 // pred_check
        %p461 = pneg %p193
      $region50: #{multi_linear_criterion.1} parent=39 // pred_check_branch
        %463 = sbr.rel (%p461) target = $region52
      $region51: #{multi_linear_criterion.1} parent=39 // pred_region
        _
      $region52: #{multi_linear_criterion.1} parent=39 // pred_fallthru
        _
    $region40: #{multi_linear_criterion.1} parent=5 // pred_fallthru
      _
    %p464 = scmp.le.s32.totalorder 2, %s11
    // Predicated region
    $region53: #{multi_linear_criterion.1} parent=5 // pred_check
      %p465 = pneg %p464
    $region54: #{multi_linear_criterion.1} parent=5 // pred_check_branch
      %467 = sbr.rel (%p465) target = $region56
    $region55: #{multi_linear_criterion.1} parent=5 // pred_region
      %s468 = ssub.s32 %s11, 2
      // Predicated region
      $region57: #{multi_linear_criterion.1} parent=55 // pred_check
        %p469 = pneg %p199
      $region58: #{multi_linear_criterion.1} parent=55 // pred_check_branch
        %471 = sbr.rel (%p469) target = $region60
      $region59: #{multi_linear_criterion.1} parent=55 // pred_region
        %p472 = scmp.lt.s32.totalorder %s24, 2
        %s473 = scalar_select %p472, %s24, 2
        %p474 = scmp.lt.s32.totalorder %s25, 0
        %s475 = scalar_select %p474, %s25, 0
        %s476 = sadd.s32 %s475, %s473
        %s477 = smul.addr %s476, 8
        %s478 = scalar_lea.vmem %s5, %s477
      $region60: #{multi_linear_criterion.1} parent=55 // pred_fallthru
        _
    $region56: #{multi_linear_criterion.1} parent=5 // pred_fallthru
      _
  $region6: #{multi_linear_criterion.1} parent=0 // loop_footer
    %s15 = sadd.s32 1, %s11
  $region7: #{multi_linear_criterion.1} parent=0 // loop_footer_branch
    %10 = sbr.rel target = $region3
  $region8: #{multi_linear_criterion.1} parent=0 // loop_exit
    _

</llo_original>
